<compile_context>
chip_gen: v5e
topology: v5e:2x2
jax: 0.10.0
libtpu: 0.0.40
codegen_flags: <defaults>
</compile_context>

<pallas_src>
import jax
import jax.numpy as jnp
from jax.experimental import pallas as pl
from jax.experimental.pallas import tpu as pltpu


def _round_up(x, m):
    return ((x + m - 1) // m) * m


def actor_kernel(xT_ref, w1_ref, w2_ref, b2_ref, w3T_ref, b3_ref, oT_ref):
    # layer1 + ReLU: bias folded into the contraction (ones row in x^T, bias column in w1).
    # bf16 MXU operands, f32 accumulation.
    h1 = jnp.dot(w1_ref[...], xT_ref[...], preferred_element_type=jnp.float32)
    h1 = jnp.maximum(h1, 0.0).astype(jnp.bfloat16)          # [128, TILE_B] bf16 -> next MXU pass

    # layer2 + bias + ReLU: bf16 MXU operands, f32 accumulation; elementwise kept f32
    # (v5e has no bf16 VALU, and f32 here costs nothing extra on v6e/v7x).
    h2 = jnp.dot(w2_ref[...], h1, preferred_element_type=jnp.float32) + b2_ref[...]
    h2 = jnp.maximum(h2, 0.0)                                # [64, TILE_B] f32

    # layer3 ([1,64] @ [64,TILE_B]) off the MXU: lane-broadcast VPU multiply + sublane
    # XLU reduce — MXU-push slot is the binding one, VPU/XLU have slack.
    out = jnp.sum(w3T_ref[...] * h2, axis=0, keepdims=True) + b3_ref[0, 0]   # [1, TILE_B]

    # 2 * tanh (EUP) and lane-dense store.
    oT_ref[...] = (2.0 * jnp.tanh(out)).astype(oT_ref.dtype)


def actor_forward(x, params, *, tile_b=8192, xla_fallback_below=1024):
    """x: [B, input_dim] float32. params: PyTorch-layout (out, in) weights, column biases."""
    B, in_dim = x.shape

    # Tiny batches: pallas_call fixed overhead dominates; plain XLA wins there.
    if B < xla_fallback_below:
        return actor_reference(x, params)

    h1_dim = params["w1"].shape[0]   # 128
    h2_dim = params["w2"].shape[0]   # 64
    out_dim = params["w3"].shape[0]  # 1

    # ---- tile-size selection ---------------------------------------------------------
    b_pad128 = _round_up(max(B, 1), 128)
    tb = min(_round_up(tile_b, 128), b_pad128)
    # Ensure >=2 grid steps when the batch allows it so the "parallel" axis can span
    # both v7x TensorCores (harmless on single-TC v5e/v6e).
    if b_pad128 >= 2 * 128:
        tb = min(tb, _round_up(pl.cdiv(b_pad128, 2), 128))
    Bp = _round_up(B, tb)

    # ---- parameter prep (one-time, tiny) ---------------------------------------------
    K1 = _round_up(in_dim + 1, 8)    # contraction dim with the folded-bias ones row, padded to 8
    w1_aug = jnp.zeros((h1_dim, K1), jnp.float32)
    w1_aug = w1_aug.at[:, :in_dim].set(params["w1"]).at[:, in_dim].set(params["b1"][:, 0])
    w1_aug = w1_aug.astype(jnp.bfloat16)                       # [128, K1] bf16
    w2_b = params["w2"].astype(jnp.bfloat16)                   # [64, 128] bf16
    b2 = params["b2"].astype(jnp.float32)                      # [64, 1]   f32
    w3T = params["w3"].T.astype(jnp.float32)                   # [64, 1]   f32 (VPU layer 3)
    b3 = params["b3"].astype(jnp.float32)                      # [1, 1]    f32 scalar (SMEM)

    # ---- x prep: feature-major bf16 slab with a ones row (fused single XLA pass) ------
    # A producer emitting feature-major bf16 x would make this a no-op.
    xT_aug = jnp.zeros((K1, Bp), jnp.bfloat16)
    xT_aug = xT_aug.at[:in_dim, :B].set(x.T.astype(jnp.bfloat16))
    xT_aug = xT_aug.at[in_dim, :B].set(1.0)

    def resident(shape):
        # constant block index -> parameter stays resident in VMEM across all grid steps
        return pl.BlockSpec(shape, lambda i: (0, 0))

    outT = pl.pallas_call(
        actor_kernel,
        out_shape=jax.ShapeDtypeStruct((out_dim, Bp), jnp.float32),
        grid=(Bp // tb,),
        in_specs=[
            pl.BlockSpec((K1, tb), lambda i: (0, i)),           # x^T tile (bf16, pipelined)
            resident(w1_aug.shape),                             # [128, K1] bf16 (bias folded)
            resident(w2_b.shape),                               # [64, 128] bf16
            resident(b2.shape),                                 # [64, 1]   f32
            resident(w3T.shape),                                # [64, 1]   f32
            pl.BlockSpec(memory_space=pltpu.MemorySpace.SMEM),  # b3 scalar [1, 1]
        ],
        out_specs=pl.BlockSpec((out_dim, tb), lambda i: (0, i)),  # lane-dense output
        compiler_params=pltpu.CompilerParams(
            dimension_semantics=("parallel",),
            vmem_limit_bytes=32 * 1024 * 1024,   # ~12 MiB used at tb=8192; fits all gens
        ),
    )(xT_aug, w1_aug, w2_b, b2, w3T, b3)

    return outT[0, :B][:, None]                                 # [B, 1]


# ---------------------------------------------------------------------------------------
# Init (matches the PyTorch module) and references.
# ---------------------------------------------------------------------------------------

def _kaiming_uniform(key, out_dim, in_dim):
    # nn.init.kaiming_uniform_ with a=0: bound = sqrt(6 / fan_in)
    bound = jnp.sqrt(6.0 / in_dim)
    return jax.random.uniform(key, (out_dim, in_dim), jnp.float32, -bound, bound)


def _linear_bias(key, out_dim, in_dim):
    # PyTorch nn.Linear default bias init: U(-1/sqrt(fan_in), 1/sqrt(fan_in))
    bound = 1.0 / jnp.sqrt(jnp.float32(in_dim))
    return jax.random.uniform(key, (out_dim,), jnp.float32, -bound, bound)


def init_actor_params(key, input_dim=4):
    k1, k2, k3, kb1, kb2, kb3 = jax.random.split(key, 6)
    return {
        "w1": _kaiming_uniform(k1, 128, input_dim), "b1": _linear_bias(kb1, 128, input_dim)[:, None],
        "w2": _kaiming_uniform(k2, 64, 128),        "b2": _linear_bias(kb2, 64, 128)[:, None],
        "w3": _kaiming_uniform(k3, 1, 64),          "b3": _linear_bias(kb3, 1, 64)[:, None],
    }


def actor_reference(x, params):
    """Exact f32 reference (module semantics)."""
    h1 = jnp.maximum(x @ params["w1"].T + params["b1"][:, 0], 0.0)
    h2 = jnp.maximum(h1 @ params["w2"].T + params["b2"][:, 0], 0.0)
    return 2.0 * jnp.tanh(h2 @ params["w3"].T + params["b3"][:, 0])


def actor_reference_mixed(x, params):
    """Reference that mirrors the kernel's dtype choices (bf16 MXU operands, f32 accum)."""
    w1 = params["w1"].astype(jnp.bfloat16)
    b1 = params["b1"][:, 0].astype(jnp.bfloat16).astype(jnp.float32)
    w2 = params["w2"].astype(jnp.bfloat16)
    xb = x.astype(jnp.bfloat16)
    h1 = jnp.maximum(jnp.dot(xb, w1.T, preferred_element_type=jnp.float32) + b1, 0.0)
    h1 = h1.astype(jnp.bfloat16)
    h2 = jnp.maximum(
        jnp.dot(h1, w2.T, preferred_element_type=jnp.float32) + params["b2"][:, 0], 0.0)
    # layer 3 as an explicit f32 elementwise sum (matches the kernel's VPU+XLU path)
    out = jnp.sum(h2 * params["w3"][0][None, :], axis=-1, keepdims=True) + params["b3"][:, 0]
    return 2.0 * jnp.tanh(out)


if __name__ == "__main__":
    key = jax.random.PRNGKey(0)
    k_param, k_x1, k_x2 = jax.random.split(key, 3)

    input_dim = 4
    params = init_actor_params(k_param, input_dim=input_dim)

    # Case 1: tiny batch (grid = 1), force the Pallas path.
    x_small = jax.random.normal(k_x1, (8, input_dim), jnp.float32)
    out_small = jax.block_until_ready(actor_forward(x_small, params, xla_fallback_below=0))
    assert out_small.shape == (8, 1)
    assert jnp.allclose(out_small, actor_reference_mixed(x_small, params), atol=5e-3, rtol=5e-3)
    assert jnp.allclose(out_small, actor_reference(x_small, params), atol=0.15, rtol=0.15)

    # Case 2: mid batch with tail padding (grid >= 2 exercises the multi-step / megacore path).
    x_mid = jax.random.normal(k_x2, (300, input_dim), jnp.float32)
    out_mid = jax.block_until_ready(actor_forward(x_mid, params, xla_fallback_below=0))
    assert out_mid.shape == (300, 1)
    assert jnp.allclose(out_mid, actor_reference_mixed(x_mid, params), atol=5e-3, rtol=5e-3)
    assert jnp.allclose(out_mid, actor_reference(x_mid, params), atol=0.15, rtol=0.15)

    # Case 3: small-batch XLA fallback path (default threshold) stays exact.
    out_fb = jax.block_until_ready(actor_forward(x_small, params))
    assert out_fb.shape == (8, 1)
    assert jnp.allclose(out_fb, actor_reference(x_small, params), atol=1e-5, rtol=1e-5)

    print("KERNEL_OK")
</pallas_src>

<mosaic_0001>
module attributes {stable_mosaic.version = 11 : i64} {
  func.func @actor_kernel(%arg0: i32, %arg1: memref<8x128xbf16, #tpu.memory_space<vmem>>, %arg2: memref<128x8xbf16, #tpu.memory_space<vmem>>, %arg3: memref<64x128xbf16, #tpu.memory_space<vmem>>, %arg4: memref<64x1xf32, #tpu.memory_space<vmem>>, %arg5: memref<64x1xf32, #tpu.memory_space<vmem>>, %arg6: memref<1x1xf32, #tpu.memory_space<smem>>, %arg7: memref<1x128xf32, #tpu.memory_space<vmem>>) attributes {dimension_semantics = [#tpu.dimension_semantics<parallel>], iteration_bounds = array<i64: 1>, scalar_prefetch = 0 : i64, scratch_operands = 0 : i64, tpu.core_type = #tpu.core_type<tc>, window_params = [{transform_indices = @transform_0, window_bounds = array<i64: 8, 128>}, {pipeline_mode = #tpu.pipeline_mode<synchronous>, transform_indices = @transform_1, window_bounds = array<i64: 128, 8>}, {pipeline_mode = #tpu.pipeline_mode<synchronous>, transform_indices = @transform_2, window_bounds = array<i64: 64, 128>}, {pipeline_mode = #tpu.pipeline_mode<synchronous>, transform_indices = @transform_3, window_bounds = array<i64: 64, 1>}, {pipeline_mode = #tpu.pipeline_mode<synchronous>, transform_indices = @transform_4, window_bounds = array<i64: 64, 1>}, {transform_indices = @transform_5, window_bounds = array<i64: 1, 1>}, {transform_indices = @transform_6, window_bounds = array<i64: 1, 128>}]} {
    %c0 = arith.constant 0 : index
    %c0_0 = arith.constant 0 : index
    %0 = vector.load %arg2[%c0, %c0_0] : memref<128x8xbf16, #tpu.memory_space<vmem>>, vector<128x8xbf16>
    %c0_1 = arith.constant 0 : index
    %c0_2 = arith.constant 0 : index
    %1 = vector.load %arg1[%c0_1, %c0_2] : memref<8x128xbf16, #tpu.memory_space<vmem>>, vector<8x128xbf16>
    %cst = arith.constant dense<0.000000e+00> : vector<128x128xf32>
    %2 = tpu.matmul %0, %1, %cst {dimension_numbers = #tpu.dot_dimension_numbers<[1], [0], [0], [1], [0, 0, 1, 1], [], []>} : vector<128x8xbf16>, vector<8x128xbf16>, vector<128x128xf32> -> vector<128x128xf32>
    %cst_3 = arith.constant 0.000000e+00 : f32
    %3 = vector.broadcast %cst_3 : f32 to vector<128x128xf32>
    %4 = arith.maximumf %2, %3 : vector<128x128xf32>
    %5 = arith.truncf %4 : vector<128x128xf32> to vector<128x128xbf16>
    %c0_4 = arith.constant 0 : index
    %c0_5 = arith.constant 0 : index
    %6 = vector.load %arg3[%c0_4, %c0_5] : memref<64x128xbf16, #tpu.memory_space<vmem>>, vector<64x128xbf16>
    %cst_6 = arith.constant dense<0.000000e+00> : vector<64x128xf32>
    %7 = tpu.matmul %6, %5, %cst_6 {dimension_numbers = #tpu.dot_dimension_numbers<[1], [0], [0], [1], [0, 0, 1, 1], [], []>} : vector<64x128xbf16>, vector<128x128xbf16>, vector<64x128xf32> -> vector<64x128xf32>
    %c0_7 = arith.constant 0 : index
    %c0_8 = arith.constant 0 : index
    %8 = vector.load %arg4[%c0_7, %c0_8] : memref<64x1xf32, #tpu.memory_space<vmem>>, vector<64x1xf32>
    %9 = vector.broadcast %8 : vector<64x1xf32> to vector<64x128xf32>
    %10 = arith.addf %7, %9 : vector<64x128xf32>
    %cst_9 = arith.constant 0.000000e+00 : f32
    %11 = vector.broadcast %cst_9 : f32 to vector<64x128xf32>
    %12 = arith.maximumf %10, %11 : vector<64x128xf32>
    %c0_10 = arith.constant 0 : index
    %c0_11 = arith.constant 0 : index
    %13 = vector.load %arg5[%c0_10, %c0_11] : memref<64x1xf32, #tpu.memory_space<vmem>>, vector<64x1xf32>
    %14 = vector.broadcast %13 : vector<64x1xf32> to vector<64x128xf32>
    %15 = arith.mulf %14, %12 : vector<64x128xf32>
    %cst_12 = arith.constant dense<0.000000e+00> : vector<128xf32>
    %16 = vector.multi_reduction <add>, %15, %cst_12 [0] : vector<64x128xf32> to vector<128xf32>
    %17 = vector.shape_cast %16 : vector<128xf32> to vector<1x128xf32>
    %c0_13 = arith.constant 0 : index
    %c0_14 = arith.constant 0 : index
    %18 = memref.load %arg6[%c0_13, %c0_14] : memref<1x1xf32, #tpu.memory_space<smem>>
    %19 = vector.broadcast %18 : f32 to vector<1x128xf32>
    %20 = arith.addf %17, %19 : vector<1x128xf32>
    %21 = math.tanh %20 : vector<1x128xf32>
    %cst_15 = arith.constant 2.000000e+00 : f32
    %22 = vector.broadcast %cst_15 : f32 to vector<1x128xf32>
    %23 = arith.mulf %22, %21 : vector<1x128xf32>
    %c0_16 = arith.constant 0 : index
    %c0_17 = arith.constant 0 : index
    %24 = vector.load %arg7[%c0_16, %c0_17] : memref<1x128xf32, #tpu.memory_space<vmem>>, vector<1x128xf32>
    tpu.vector_store %arg7[%c0_16, %c0_17], %23 {strides = array<i32>} : memref<1x128xf32, #tpu.memory_space<vmem>>, vector<1x128xf32>,
    return
  }
  func.func @transform_0(%arg0: i32) -> (i32, i32) {
    %c0_i32 = arith.constant 0 : i32
    %c0_i32_0 = arith.constant 0 : i32
    return %c0_i32, %arg0 : i32, i32
  }
  func.func @transform_1(%arg0: i32) -> (i32, i32) {
    %c0_i32 = arith.constant 0 : i32
    %c0_i32_0 = arith.constant 0 : i32
    %c0_i32_1 = arith.constant 0 : i32
    return %c0_i32, %c0_i32_0 : i32, i32
  }
  func.func @transform_2(%arg0: i32) -> (i32, i32) {
    %c0_i32 = arith.constant 0 : i32
    %c0_i32_0 = arith.constant 0 : i32
    %c0_i32_1 = arith.constant 0 : i32
    return %c0_i32, %c0_i32_0 : i32, i32
  }
  func.func @transform_3(%arg0: i32) -> (i32, i32) {
    %c0_i32 = arith.constant 0 : i32
    %c0_i32_0 = arith.constant 0 : i32
    %c0_i32_1 = arith.constant 0 : i32
    return %c0_i32, %c0_i32_0 : i32, i32
  }
  func.func @transform_4(%arg0: i32) -> (i32, i32) {
    %c0_i32 = arith.constant 0 : i32
    %c0_i32_0 = arith.constant 0 : i32
    %c0_i32_1 = arith.constant 0 : i32
    return %c0_i32, %c0_i32_0 : i32, i32
  }
  func.func @transform_5(%arg0: i32) -> (i32, i32) {
    %c0_i32 = arith.constant 0 : i32
    %c0_i32_0 = arith.constant 0 : i32
    %c0_i32_1 = arith.constant 0 : i32
    return %c0_i32, %c0_i32_0 : i32, i32
  }
  func.func @transform_6(%arg0: i32) -> (i32, i32) {
    %c0_i32 = arith.constant 0 : i32
    %c0_i32_0 = arith.constant 0 : i32
    return %c0_i32, %arg0 : i32, i32
  }
}

</mosaic_0001>

<llo_original>
// kernel: tpu_custom_call.1
$region0: #{tpu_custom_call.1}
  #allocation0 [shape = 'u32[]', space=smem, size = 0x4, offset = 0x4, fixed_abs, tag = 'smem constant byte address 0x4 - core index']
  #allocation1 [shape = 'u32[72,128]{1,0:T(1,128)}', space=vmem, size = 0x9000, scoped, tag = 'internal scratch']
  #allocation2 [shape = 'f32[1,1]{1,0:T(1,128)S(6)}', space=smem, size = 0x200, scoped, tag = 'scoped memory for tpu_custom_call.1']
  %s0 = inlined_call_operand.vmem [shape: bf16[8,128], index: 0, kind: input, shape index: {}]
  %s1 = inlined_call_operand.vmem [shape: bf16[128,8], index: 1, kind: input, shape index: {}]
  %s2 = inlined_call_operand.vmem [shape: bf16[64,128], index: 2, kind: input, shape index: {}]
  %s3 = inlined_call_operand.vmem [shape: f32[64,1], index: 3, kind: input, shape index: {}]
  %s4 = inlined_call_operand.vmem [shape: f32[64,1], index: 4, kind: input, shape index: {}]
  %s5 = inlined_call_operand.<no memory space> [shape: f32[1,1], index: 5, kind: input, shape index: {}]
  %s6 = inlined_call_operand.hbm [shape: f32[1,128], index: 6, kind: output, shape index: {}]
  %s7 = sld [smem:[#allocation0]]
  $region34: #{tpu_custom_call.1} parent=0
    _
  %s9 = ssub.s32 1, %s7
  %s10 = scalar_select 0, %s9, %s7
  %11 = sst [smem:[#allocation2]] %s5
  $region1: #{tpu_custom_call.1} parent=0
    #allocation3 [shape = 'u8[512]{0}', space=vmem, size = 0x400, scoped, tag = 'output window, operand 0, single buffered']
    #allocation4 [shape = 's32[1]{0}', space=sflag, size = 0x4, scoped, tag = 'scoped memory for tpu_custom_call.1']
    %12 = vsyncpa [#allocation4], 0
    // Predicated region
    $region2: #{tpu_custom_call.1} parent=1 // pred_check
      _
    $region3: #{tpu_custom_call.1} parent=1 // pred_check_branch
      %14 = sbr.rel (0) target = $region5
    $region4: #{tpu_custom_call.1} parent=1 // pred_region
      _
    $region5: #{tpu_custom_call.1} parent=1 // pred_fallthru
      _
    // Predicated region
    $region6: #{tpu_custom_call.1} parent=1 // pred_check
      _
    $region7: #{tpu_custom_call.1} parent=1 // pred_check_branch
      %16 = sbr.rel (0) target = $region9
    $region8: #{tpu_custom_call.1} parent=1 // pred_region
      _
    $region9: #{tpu_custom_call.1} parent=1 // pred_fallthru
      _
    // Predicated region
    $region10: #{tpu_custom_call.1} parent=1 // pred_check
      _
    $region11: #{tpu_custom_call.1} parent=1 // pred_check_branch
      %18 = sbr.rel (0) target = $region13
    $region12: #{tpu_custom_call.1} parent=1 // pred_region
      _
    $region13: #{tpu_custom_call.1} parent=1 // pred_fallthru
      _
    // Predicated region
    $region14: #{tpu_custom_call.1} parent=1 // pred_check
      _
    $region15: #{tpu_custom_call.1} parent=1 // pred_check_branch
      %20 = sbr.rel (0) target = $region17
    $region16: #{tpu_custom_call.1} parent=1 // pred_region
      _
    $region17: #{tpu_custom_call.1} parent=1 // pred_fallthru
      _
    // Predicated region
    $region18: #{tpu_custom_call.1} parent=1 // pred_check
      _
    $region19: #{tpu_custom_call.1} parent=1 // pred_check_branch
      %22 = sbr.rel (0) target = $region21
    $region20: #{tpu_custom_call.1} parent=1 // pred_region
      _
    $region21: #{tpu_custom_call.1} parent=1 // pred_fallthru
      _
    // Predicated region
    $region22: #{tpu_custom_call.1} parent=1 // pred_check
      _
    $region23: #{tpu_custom_call.1} parent=1 // pred_check_branch
      %24 = sbr.rel (0) target = $region25
    $region24: #{tpu_custom_call.1} parent=1 // pred_region
      _
    $region25: #{tpu_custom_call.1} parent=1 // pred_fallthru
      _
    %v26 = vld [vmem:[%s1] sm:$0xf]
    %v27 = vld [vmem:[%s1 + $0x4] sm:$0xf]
    %v28 = vld [vmem:[%s1 + $0x8] sm:$0xf]
    %v29 = vld [vmem:[%s1 + $0xc] sm:$0xf]
    %v30 = vld [vmem:[%s1 + $0x10] sm:$0xf]
    %v31 = vld [vmem:[%s1 + $0x14] sm:$0xf]
    %v32 = vld [vmem:[%s1 + $0x18] sm:$0xf]
    %v33 = vld [vmem:[%s1 + $0x1c] sm:$0xf]
    %v34 = vld [vmem:[%s1 + $0x20] sm:$0xf]
    %v35 = vld [vmem:[%s1 + $0x24] sm:$0xf]
    %v36 = vld [vmem:[%s1 + $0x28] sm:$0xf]
    %v37 = vld [vmem:[%s1 + $0x2c] sm:$0xf]
    %v38 = vld [vmem:[%s1 + $0x30] sm:$0xf]
    %v39 = vld [vmem:[%s1 + $0x34] sm:$0xf]
    %v40 = vld [vmem:[%s1 + $0x38] sm:$0xf]
    %v41 = vld [vmem:[%s1 + $0x3c] sm:$0xf]
    %v42 = vld [vmem:[%s0] sm:$0xf]
    %v59 = vunpack.c.l.b16 %v26
    %v60 = vunpack.c.l.b16 %v27
    %v61 = vunpack.c.l.b16 %v28
    %v62 = vunpack.c.l.b16 %v29
    %v63 = vunpack.c.l.b16 %v30
    %v64 = vunpack.c.l.b16 %v31
    %v65 = vunpack.c.l.b16 %v32
    %v66 = vunpack.c.l.b16 %v33
    %v67 = vunpack.c.l.b16 %v34
    %v68 = vunpack.c.l.b16 %v35
    %v69 = vunpack.c.l.b16 %v36
    %v70 = vunpack.c.l.b16 %v37
    %v71 = vunpack.c.l.b16 %v38
    %v72 = vunpack.c.l.b16 %v39
    %v73 = vunpack.c.l.b16 %v40
    %v74 = vunpack.c.l.b16 %v41
    %v75 = vpack.c.b16 %v60, %v59
    %v76 = vpack.c.b16 %v62, %v61
    %v77 = vpack.c.b16 %v64, %v63
    %v78 = vpack.c.b16 %v66, %v65
    %v79 = vpack.c.b16 %v68, %v67
    %v80 = vpack.c.b16 %v70, %v69
    %v81 = vpack.c.b16 %v72, %v71
    %v82 = vpack.c.b16 %v74, %v73
    %vm83 = vcmask 64512
    %v85 = vsel %vm83, %v75, 0
    %v88 = vsel %vm83, %v76, 0
    %v91 = vsel %vm83, %v77, 0
    %v94 = vsel %vm83, %v78, 0
    %v97 = vsel %vm83, %v79, 0
    %v100 = vsel %vm83, %v80, 0
    %v103 = vsel %vm83, %v81, 0
    %v106 = vsel %vm83, %v82, 0
    %vm108 = vcmask 1043456
    %v110 = vsel %vm108, %v42, 0
    %112 = vmatpush.bf16.msra.mxu0 0
    %113 = vmatpush.bf16.msra.mxu0 0
    %114 = vmatpush.bf16.msra.mxu0 0
    %115 = vmatpush.bf16.msra.mxu0 0
    %116 = vmatpush.bf16.msra.mxu0 0
    %117 = vmatpush.bf16.msra.mxu0 0
    %118 = vmatpush.bf16.msra.mxu0 0
    %119 = vmatpush.bf16.msra.mxu0 %v110
    %120 = vmatmul.bf16.gmra.mxu0 %v85
    %v121 = vpop.f32.mrf.mxu0
    %v122 = vadd.f32 0.0, %v121
    %v123 = vpop.f32.mrf.mxu0
    %v124 = vadd.f32 0.0, %v123
    %125 = vmatmul.bf16.gmra.mxu0 %v88
    %v126 = vpop.f32.mrf.mxu0
    %v127 = vadd.f32 0.0, %v126
    %v128 = vpop.f32.mrf.mxu0
    %v129 = vadd.f32 0.0, %v128
    %130 = vmatmul.bf16.gmra.mxu0 %v91
    %v131 = vpop.f32.mrf.mxu0
    %v132 = vadd.f32 0.0, %v131
    %v133 = vpop.f32.mrf.mxu0
    %v134 = vadd.f32 0.0, %v133
    %135 = vmatmul.bf16.gmra.mxu0 %v94
    %v136 = vpop.f32.mrf.mxu0
    %v137 = vadd.f32 0.0, %v136
    %v138 = vpop.f32.mrf.mxu0
    %v139 = vadd.f32 0.0, %v138
    %140 = vmatmul.bf16.gmra.mxu0 %v97
    %v141 = vpop.f32.mrf.mxu0
    %v142 = vadd.f32 0.0, %v141
    %v143 = vpop.f32.mrf.mxu0
    %v144 = vadd.f32 0.0, %v143
    %145 = vmatmul.bf16.gmra.mxu0 %v100
    %v146 = vpop.f32.mrf.mxu0
    %v147 = vadd.f32 0.0, %v146
    %v148 = vpop.f32.mrf.mxu0
    %v149 = vadd.f32 0.0, %v148
    %150 = vmatmul.bf16.gmra.mxu0 %v103
    %v151 = vpop.f32.mrf.mxu0
    %v152 = vadd.f32 0.0, %v151
    %v153 = vpop.f32.mrf.mxu0
    %v154 = vadd.f32 0.0, %v153
    %155 = vmatmul.bf16.gmra.mxu0 %v106
    %v156 = vpop.f32.mrf.mxu0
    %v157 = vadd.f32 0.0, %v156
    %v158 = vpop.f32.mrf.mxu0
    %v159 = vadd.f32 0.0, %v158
    %160 = vdwg.mxu0
    %v161 = vmax.f32 %v122, 0.0
    %v162 = vmax.f32 %v124, 0.0
    %v163 = vmax.f32 %v127, 0.0
    %v164 = vmax.f32 %v129, 0.0
    %v165 = vmax.f32 %v132, 0.0
    %v166 = vmax.f32 %v134, 0.0
    %v167 = vmax.f32 %v137, 0.0
    %v168 = vmax.f32 %v139, 0.0
    %v169 = vmax.f32 %v142, 0.0
    %v170 = vmax.f32 %v144, 0.0
    %v171 = vmax.f32 %v147, 0.0
    %v172 = vmax.f32 %v149, 0.0
    %v173 = vmax.f32 %v152, 0.0
    %v174 = vmax.f32 %v154, 0.0
    %v175 = vmax.f32 %v157, 0.0
    %v176 = vmax.f32 %v159, 0.0
    %v177 = vpack.c.bf16 %v162, %v161
    %v178 = vpack.c.bf16 %v164, %v163
    %v179 = vpack.c.bf16 %v166, %v165
    %v180 = vpack.c.bf16 %v168, %v167
    %v181 = vpack.c.bf16 %v170, %v169
    %v182 = vpack.c.bf16 %v172, %v171
    %v183 = vpack.c.bf16 %v174, %v173
    %v184 = vpack.c.bf16 %v176, %v175
    %v185 = vld [vmem:[%s2] sm:$0xf]
    %v186 = vld [vmem:[%s2 + $0x4] sm:$0xf]
    %v187 = vld [vmem:[%s2 + $0x8] sm:$0xf]
    %v188 = vld [vmem:[%s2 + $0xc] sm:$0xf]
    %v189 = vld [vmem:[%s2 + $0x10] sm:$0xf]
    %v190 = vld [vmem:[%s2 + $0x14] sm:$0xf]
    %v191 = vld [vmem:[%s2 + $0x18] sm:$0xf]
    %v192 = vld [vmem:[%s2 + $0x1c] sm:$0xf]
    %v193 = vld [vmem:[%s3] sm:$0xff]
    %v194 = vld [vmem:[%s3 + $0x8] sm:$0xff]
    %v195 = vld [vmem:[%s3 + $0x10] sm:$0xff]
    %v196 = vld [vmem:[%s3 + $0x18] sm:$0xff]
    %v197 = vld [vmem:[%s3 + $0x20] sm:$0xff]
    %v198 = vld [vmem:[%s3 + $0x28] sm:$0xff]
    %v199 = vld [vmem:[%s3 + $0x30] sm:$0xff]
    %v200 = vld [vmem:[%s3 + $0x38] sm:$0xff]
    %202 = vset.pattern.permute.xlu0 0
    %203 = vperm.xlu0 %202, %v193
    %v204 = vpop.permute.xlu0 %203
    %207 = vset.pattern.permute.xlu0 0
    %208 = vperm.xlu0 %207, %v194
    %v209 = vpop.permute.xlu0 %208
    %212 = vset.pattern.permute.xlu0 0
    %213 = vperm.xlu0 %212, %v195
    %v214 = vpop.permute.xlu0 %213
    %217 = vset.pattern.permute.xlu0 0
    %218 = vperm.xlu0 %217, %v196
    %v219 = vpop.permute.xlu0 %218
    %222 = vset.pattern.permute.xlu0 0
    %223 = vperm.xlu0 %222, %v197
    %v224 = vpop.permute.xlu0 %223
    %227 = vset.pattern.permute.xlu0 0
    %228 = vperm.xlu0 %227, %v198
    %v229 = vpop.permute.xlu0 %228
    %232 = vset.pattern.permute.xlu0 0
    %233 = vperm.xlu0 %232, %v199
    %v234 = vpop.permute.xlu0 %233
    %237 = vset.pattern.permute.xlu0 0
    %238 = vperm.xlu0 %237, %v200
    %v239 = vpop.permute.xlu0 %238
    %v249 = vunpack.c.l.b16 %v185
    %v250 = vunpack.c.l.b16 %v186
    %v251 = vunpack.c.l.b16 %v187
    %v252 = vunpack.c.l.b16 %v188
    %v253 = vunpack.c.l.b16 %v189
    %v254 = vunpack.c.l.b16 %v190
    %v255 = vunpack.c.l.b16 %v191
    %v256 = vunpack.c.l.b16 %v192
    %v257 = vpack.c.b16 %v250, %v249
    %v258 = vpack.c.b16 %v252, %v251
    %v259 = vpack.c.b16 %v254, %v253
    %v260 = vpack.c.b16 %v256, %v255
    %265 = vmatpush.bf16.msra.mxu0 %v184
    %266 = vmatpush.bf16.msra.mxu0 %v183
    %267 = vmatpush.bf16.msra.mxu0 %v182
    %268 = vmatpush.bf16.msra.mxu0 %v181
    %269 = vmatpush.bf16.msra.mxu0 %v180
    %270 = vmatpush.bf16.msra.mxu0 %v179
    %271 = vmatpush.bf16.msra.mxu0 %v178
    %272 = vmatpush.bf16.msra.mxu0 %v177
    %273 = vmatmul.bf16.gmra.mxu0 %v257
    %v274 = vpop.f32.mrf.mxu0
    %v275 = vadd.f32 %v204, %v274
    %v276 = vpop.f32.mrf.mxu0
    %v277 = vadd.f32 %v209, %v276
    %278 = vmatmul.bf16.gmra.mxu0 %v258
    %v279 = vpop.f32.mrf.mxu0
    %v280 = vadd.f32 %v214, %v279
    %v281 = vpop.f32.mrf.mxu0
    %v282 = vadd.f32 %v219, %v281
    %283 = vmatmul.bf16.gmra.mxu0 %v259
    %v284 = vpop.f32.mrf.mxu0
    %v285 = vadd.f32 %v224, %v284
    %v286 = vpop.f32.mrf.mxu0
    %v287 = vadd.f32 %v229, %v286
    %288 = vmatmul.bf16.gmra.mxu0 %v260
    %v289 = vpop.f32.mrf.mxu0
    %v290 = vadd.f32 %v234, %v289
    %v291 = vpop.f32.mrf.mxu0
    %v292 = vadd.f32 %v239, %v291
    %293 = vdwg.mxu0
    %v294 = vmax.f32 %v275, 0.0
    %v295 = vmax.f32 %v277, 0.0
    %v296 = vmax.f32 %v280, 0.0
    %v297 = vmax.f32 %v282, 0.0
    %v298 = vmax.f32 %v285, 0.0
    %v299 = vmax.f32 %v287, 0.0
    %v300 = vmax.f32 %v290, 0.0
    %v301 = vmax.f32 %v292, 0.0
    %v302 = vld [vmem:[%s4] sm:$0xff]
    %v303 = vld [vmem:[%s4 + $0x8] sm:$0xff]
    %v304 = vld [vmem:[%s4 + $0x10] sm:$0xff]
    %v305 = vld [vmem:[%s4 + $0x18] sm:$0xff]
    %v306 = vld [vmem:[%s4 + $0x20] sm:$0xff]
    %v307 = vld [vmem:[%s4 + $0x28] sm:$0xff]
    %v308 = vld [vmem:[%s4 + $0x30] sm:$0xff]
    %v309 = vld [vmem:[%s4 + $0x38] sm:$0xff]
    %311 = vset.pattern.permute.xlu0 0
    %312 = vperm.xlu0 %311, %v302
    %v313 = vpop.permute.xlu0 %312
    %316 = vset.pattern.permute.xlu0 0
    %317 = vperm.xlu0 %316, %v303
    %v318 = vpop.permute.xlu0 %317
    %321 = vset.pattern.permute.xlu0 0
    %322 = vperm.xlu0 %321, %v304
    %v323 = vpop.permute.xlu0 %322
    %326 = vset.pattern.permute.xlu0 0
    %327 = vperm.xlu0 %326, %v305
    %v328 = vpop.permute.xlu0 %327
    %331 = vset.pattern.permute.xlu0 0
    %332 = vperm.xlu0 %331, %v306
    %v333 = vpop.permute.xlu0 %332
    %336 = vset.pattern.permute.xlu0 0
    %337 = vperm.xlu0 %336, %v307
    %v338 = vpop.permute.xlu0 %337
    %341 = vset.pattern.permute.xlu0 0
    %342 = vperm.xlu0 %341, %v308
    %v343 = vpop.permute.xlu0 %342
    %346 = vset.pattern.permute.xlu0 0
    %347 = vperm.xlu0 %346, %v309
    %v348 = vpop.permute.xlu0 %347
    %v350 = vmul.f32 %v313, %v294
    %v351 = vmul.f32 %v318, %v295
    %v352 = vmul.f32 %v323, %v296
    %v353 = vmul.f32 %v328, %v297
    %v354 = vmul.f32 %v333, %v298
    %v355 = vmul.f32 %v338, %v299
    %v356 = vmul.f32 %v343, %v300
    %v357 = vmul.f32 %v348, %v301
    %v358 = vadd.f32 %v350, %v351
    %v359 = vadd.f32 %v358, %v352
    %v360 = vadd.f32 %v359, %v353
    %v361 = vadd.f32 %v360, %v354
    %v362 = vadd.f32 %v361, %v355
    %v363 = vadd.f32 %v362, %v356
    %v364 = vadd.f32 %v363, %v357
    %v365 = vrot.slane %v364, 4
    %v366 = vadd.f32 %v364, %v365
    %v367 = vrot.slane %v366, 2
    %v368 = vadd.f32 %v366, %v367
    %v369 = vrot.slane %v368, 1
    %v370 = vadd.f32 %v368, %v369
    %s371 = sld [smem:[#allocation2]]
    %v372 = vstv %s371
    %v373 = vadd.f32 %v370, %v372
    %v374 = vtanh.pop %v373
    %v375 = vmul.f32 %v374, 2.0
    %376 = vst [vmem:[#allocation3] sm:$0x1] %v375
    // Predicated region
    $region26: #{tpu_custom_call.1} parent=1 // pred_check
      _
    $region27: #{tpu_custom_call.1} parent=1 // pred_check_branch
      %378 = sbr.rel (0) target = $region29
    $region28: #{tpu_custom_call.1} parent=1 // pred_region
      %380 = vsyncadd [#allocation4], 0
      %s382 = sshll.u32 [#allocation3], 4
      %s383 = int_to_ptr.vmem [resolvable:$true] %s382
      %s384 = sshll.u32 %s6, 4
      %s385 = int_to_ptr.hbm [resolvable:$true] %s384
      %387 = dma.vmem_to_hbm [thread:$0]  %s383, 16, %s385, [#allocation4]
    $region29: #{tpu_custom_call.1} parent=1 // pred_fallthru
      _
    // Predicated region
    $region30: #{tpu_custom_call.1} parent=1 // pred_check
      _
    $region31: #{tpu_custom_call.1} parent=1 // pred_check_branch
      %389 = sbr.rel (0) target = $region33
    $region32: #{tpu_custom_call.1} parent=1 // pred_region
      %391 = dma.done [#allocation4], 16
    $region33: #{tpu_custom_call.1} parent=1 // pred_fallthru
      _
    %392 = vsyncpa [#allocation4], 1

</llo_original>
